<compile_context>
chip_gen: v5e
topology: v5e:2x2
jax: 0.10.0
libtpu: 0.0.40
codegen_flags: <defaults>
</compile_context>

<pallas_src>
import math
import functools

import jax
import jax.numpy as jnp
from jax.experimental import pallas as pl
from jax.experimental.pallas import tpu as pltpu


def _round_up(x, m):
    return ((x + m - 1) // m) * m


# ---------------------------------------------------------------------------
# Parameter init (deterministic), mimicking he_orthogonal_init + zero bias.
# ---------------------------------------------------------------------------
def he_orthogonal_init(key, out_features, in_features, dtype=jnp.float32):
    """Orthogonal init scaled so Var(w) ~ 1/fan_in (He-style), like GemNet."""
    a = jax.random.normal(key, (max(out_features, in_features),
                                min(out_features, in_features)), dtype=jnp.float32)
    q, r = jnp.linalg.qr(a)
    d = jnp.sign(jnp.diag(r))
    d = jnp.where(d == 0, 1.0, d)
    q = q * d[None, :]
    if out_features < in_features:
        w = q.T[:out_features, :in_features]
    else:
        w = q[:out_features, :in_features]
    fan_in = in_features
    w = w * jnp.sqrt(1.0 / (fan_in * jnp.var(w) + 1e-12))
    return w.astype(dtype)


# ---------------------------------------------------------------------------
# Kernel bodies
# ---------------------------------------------------------------------------
def _body_fast(x_ref, w_ref, b_ref, o_ref, pre_act, post_act):
    """Single K block: dot + bias + activation straight to o_ref (no scratch)."""
    x = x_ref[...]
    if pre_act is not None:
        x = pre_act(x)                      # native dtype; MXU stays full rate
    y = jnp.dot(x, w_ref[...], preferred_element_type=jnp.float32)
    if b_ref is not None:
        y = y + b_ref[...].astype(jnp.float32)
    if post_act is not None:
        y = post_act(y)
    o_ref[...] = y.astype(o_ref.dtype)


def _kernel_fast_bias(x_ref, w_ref, b_ref, o_ref, *, pre_act, post_act):
    _body_fast(x_ref, w_ref, b_ref, o_ref, pre_act, post_act)


def _kernel_fast_nobias(x_ref, w_ref, o_ref, *, pre_act, post_act):
    _body_fast(x_ref, w_ref, None, o_ref, pre_act, post_act)


def _body_acc(x_ref, w_ref, b_ref, o_ref, acc_ref, pre_act, post_act):
    """K-tiled reduction with f32 VMEM accumulator."""
    k = pl.program_id(2)

    @pl.when(k == 0)
    def _():
        acc_ref[...] = jnp.zeros_like(acc_ref)

    x = x_ref[...]
    if pre_act is not None:
        x = pre_act(x)
    acc_ref[...] += jnp.dot(x, w_ref[...], preferred_element_type=jnp.float32)

    @pl.when(k == pl.num_programs(2) - 1)
    def _():
        y = acc_ref[...]
        if b_ref is not None:
            y = y + b_ref[...].astype(jnp.float32)
        if post_act is not None:
            y = post_act(y)
        o_ref[...] = y.astype(o_ref.dtype)


def _kernel_acc_bias(x_ref, w_ref, b_ref, o_ref, acc_ref, *, pre_act, post_act):
    _body_acc(x_ref, w_ref, b_ref, o_ref, acc_ref, pre_act, post_act)


def _kernel_acc_nobias(x_ref, w_ref, o_ref, acc_ref, *, pre_act, post_act):
    _body_acc(x_ref, w_ref, None, o_ref, acc_ref, pre_act, post_act)


# ---------------------------------------------------------------------------
# Tile selection helpers
# ---------------------------------------------------------------------------
def _pick_span_tile(dim, pref, quantum):
    """Tile for a non-contraction axis (rows / out-cols).

    Partial last blocks are fine here: OOB reads only produce rows/cols whose
    output writes are masked. Prefer an exact divisor >= pref/2, else use pref.
    """
    pref = max(quantum, (pref // quantum) * quantum)
    if dim <= pref:
        return dim                                    # single full-extent block
    for t in range(pref, max(pref // 2, quantum) - 1, -quantum):
        if dim % t == 0:
            return t                                  # exact divisor, no partial block
    return pref                                       # partial (masked) last block


def _pick_k_tile(K, full_cap, pref):
    """Tile for the contraction axis. Partial blocks are NOT safe here; either use
    the full extent, an exact divisor, or zero-pad K (last resort)."""
    pref = max(128, (pref // 128) * 128)
    if K <= full_cap:
        return K, K                                   # fast path: one K block
    for t in range(pref, max(pref // 2, 128) - 1, -128):
        if K % t == 0:
            return t, K
    return pref, _round_up(K, pref)                   # needs zero-padding of x / W rows


# ---------------------------------------------------------------------------
# Wrapper
# ---------------------------------------------------------------------------
def dense_forward(x, weight_t, bias=None, activation=None, activation_first=False,
                  *, row_tile=None, out_tile=None, k_tile=512, k_full_cap=2048):
    """Equivalent of Dense.forward.

    x:        (N, in_features)
    weight_t: (in_features, out_features)   -- pre-transposed weight
    bias:     (out_features,) or None
    """
    N, K = x.shape
    Kw, out_features = weight_t.shape
    assert Kw == K

    x_it = jnp.dtype(x.dtype).itemsize
    w_it = jnp.dtype(weight_t.dtype).itemsize
    o_it = x_it
    b_it = jnp.dtype(bias.dtype).itemsize if bias is not None else 0

    # dtype-aware defaults: bf16 tiles of ~1024 reach the MXU roofline on v6e/v7x,
    # f32 keeps 512 (footprint and v5e MXU).
    if row_tile is None:
        row_tile = 1024 if x_it <= 2 else 512
    if out_tile is None:
        out_tile = 1024 if w_it <= 2 else 512

    # ---- tile selection --------------------------------------------------
    tm = _pick_span_tile(N, row_tile, 8)
    tn = _pick_span_tile(out_features, out_tile, 128)
    tk, k_pad = _pick_k_tile(K, k_full_cap, k_tile)
    g_k = k_pad // tk

    # v7x megacore: make sure there are >= 2 parallel blocks for small layers.
    if pl.cdiv(N, tm) * pl.cdiv(out_features, tn) == 1 and N >= 16:
        tm = _round_up(pl.cdiv(N, 2), 8)

    # ---- VMEM budget (derived from the device, always set the limit) ------
    try:
        vmem_cap = int(pltpu.get_tpu_info().vmem_capacity_bytes)
    except Exception:
        vmem_cap = 64 << 20                            # conservative (v7x per-TC)
    budget = (vmem_cap * 3) // 4

    def _est(tm_):
        e = 2 * (tm_ * tk * x_it + tk * tn * w_it) + 2 * tm_ * tn * o_it
        if g_k > 1:
            e += tm_ * tn * 4                          # f32 accumulator scratch
        if bias is not None:
            e += 2 * tn * b_it
        return e

    est = _est(tm)
    while est > budget and tm > 8:                     # defensive; rarely triggers
        tm = max(8, _round_up(tm // 2, 8))
        est = _est(tm)
    vmem_limit = min(int(vmem_cap * 0.85), max(int(est * 1.5), 16 << 20))

    g_m = pl.cdiv(N, tm)
    g_n = pl.cdiv(out_features, tn)

    # ---- activation placement ---------------------------------------------
    pre_act = post_act = None
    if activation is not None:
        if activation_first:
            if g_n > 1:
                # would be recomputed once per out-column tile -> apply once outside
                x = activation(x)
            else:
                pre_act = activation
        else:
            post_act = activation

    # ---- contraction-axis zero padding (last resort only) -----------------
    if k_pad != K:
        x = jnp.pad(x, ((0, 0), (0, k_pad - K)))
        weight_t = jnp.pad(weight_t, ((0, k_pad - K), (0, 0)))

    has_bias = bias is not None
    args = [x, weight_t]
    if has_bias:
        args.append(bias.reshape(1, out_features))

    # NOTE: if out_features < 128 the output stores are lane-masked; acceptable for
    # these small layers (padding the weight lane dim to 128 is pure layout plumbing).

    if g_k == 1:
        grid = (g_m, g_n)
        in_specs = [pl.BlockSpec((tm, tk), lambda i, j: (i, 0)),
                    pl.BlockSpec((tk, tn), lambda i, j: (0, j))]
        if has_bias:
            in_specs.append(pl.BlockSpec((1, tn), lambda i, j: (0, j)))
        out_spec = pl.BlockSpec((tm, tn), lambda i, j: (i, j))
        scratch = []
        semantics = ("parallel", "parallel")
        body = _kernel_fast_bias if has_bias else _kernel_fast_nobias
    else:
        grid = (g_m, g_n, g_k)
        in_specs = [pl.BlockSpec((tm, tk), lambda i, j, k: (i, k)),
                    pl.BlockSpec((tk, tn), lambda i, j, k: (k, j))]
        if has_bias:
            in_specs.append(pl.BlockSpec((1, tn), lambda i, j, k: (0, j)))
        out_spec = pl.BlockSpec((tm, tn), lambda i, j, k: (i, j))
        scratch = [pltpu.VMEM((tm, tn), jnp.float32)]
        semantics = ("parallel", "parallel", "arbitrary")
        body = _kernel_acc_bias if has_bias else _kernel_acc_nobias

    kernel = functools.partial(body, pre_act=pre_act, post_act=post_act)

    flops = 2 * N * K * out_features
    bytes_accessed = N * K * x_it + K * out_features * w_it + N * out_features * o_it
    if has_bias:
        bytes_accessed += out_features * b_it
    transcendentals = 0
    if activation is not None:
        transcendentals = N * (K if activation_first else out_features)
    cost = pl.CostEstimate(flops=int(flops),
                           transcendentals=int(transcendentals),
                           bytes_accessed=int(bytes_accessed))

    out = pl.pallas_call(
        kernel,
        out_shape=jax.ShapeDtypeStruct((N, out_features), x.dtype),
        grid_spec=pltpu.PrefetchScalarGridSpec(
            num_scalar_prefetch=0,
            grid=grid,
            in_specs=in_specs,
            out_specs=out_spec,
            scratch_shapes=scratch,
        ),
        compiler_params=pltpu.CompilerParams(
            dimension_semantics=semantics,
            vmem_limit_bytes=int(vmem_limit)),
        cost_estimate=cost,
    )(*args)
    return out


# ---------------------------------------------------------------------------
# Small "module" wrapper mirroring the PyTorch Dense class.
# ---------------------------------------------------------------------------
class Dense:
    def __init__(self, in_features, out_features, bias=True, activation_fn=None,
                 activation_first=False, *, key=None, dtype=jnp.float32):
        key = jax.random.PRNGKey(0) if key is None else key
        if in_features != 1:
            w = he_orthogonal_init(key, out_features, in_features, dtype)
        else:
            # PyTorch default nn.Linear init when in_features == 1.
            bound = 1.0 / math.sqrt(in_features)
            w = jax.random.uniform(key, (out_features, in_features),
                                   minval=-bound, maxval=bound, dtype=dtype)
        # Stored pre-transposed as (in, out): no per-call transpose / HBM traffic.
        self.weight_t = jnp.asarray(w.T)
        self.bias = jnp.zeros((out_features,), dtype) if bias else None
        self.activation_fn = activation_fn            # jnp-callable or None (Identity)
        self.activation_first = activation_first
        self.in_features = in_features
        self.out_features = out_features

    def __call__(self, x, x_type=None):
        lead = x.shape[:-1]
        x2d = x.reshape(-1, self.in_features)
        y = dense_forward(x2d, self.weight_t, self.bias,
                          activation=self.activation_fn,
                          activation_first=self.activation_first)
        return y.reshape(*lead, self.out_features)


if __name__ == "__main__":
    key = jax.random.PRNGKey(0)
    k_x, k_w, k_x2, k_w2 = jax.random.split(key, 4)

    # ---- Test 1: default Dense (bias, Identity activation) --------------
    N, in_features, out_features = 16, 32, 64
    x = jax.random.normal(k_x, (N, in_features), dtype=jnp.float32)
    layer = Dense(in_features, out_features, bias=True,
                  activation_fn=None, activation_first=False, key=k_w)
    y = layer(x)
    jax.block_until_ready(y)
    y_ref = x @ layer.weight_t + layer.bias[None, :]
    assert jnp.allclose(y, y_ref, atol=1e-4, rtol=1e-4)

    # ---- Test 2: SiLU, activation_first=True, fused in-kernel (fast path) -
    layer2 = Dense(in_features, out_features, bias=True,
                   activation_fn=jax.nn.silu, activation_first=True, key=k_w)
    y2 = layer2(x)
    jax.block_until_ready(y2)
    y2_ref = jax.nn.silu(x) @ layer2.weight_t + layer2.bias[None, :]
    assert jnp.allclose(y2, y2_ref, atol=1e-4, rtol=1e-4)

    # ---- Test 3: non-multiple-of-8 row count (full-extent row block) ------
    x3 = jax.random.normal(k_x2, (13, in_features), dtype=jnp.float32)
    layer3 = Dense(in_features, out_features, bias=True,
                   activation_fn=jax.nn.silu, activation_first=False, key=k_w)
    y3 = layer3(x3)
    jax.block_until_ready(y3)
    y3_ref = jax.nn.silu(x3 @ layer3.weight_t + layer3.bias[None, :])
    assert jnp.allclose(y3, y3_ref, atol=1e-4, rtol=1e-4)

    # ---- Test 4: no-bias, forced tiling: partial row / out-col blocks,
    #              K-reduction accumulator path, hoisted activation_first ----
    in4, out4 = 256, 192
    w4 = he_orthogonal_init(k_w2, out4, in4).T        # (in, out)
    x4 = jax.random.normal(k_x2, (100, in4), dtype=jnp.float32)
    y4 = dense_forward(x4, w4, bias=None, activation=jax.nn.silu,
                       activation_first=True,
                       row_tile=64, out_tile=128, k_tile=128, k_full_cap=128)
    jax.block_until_ready(y4)
    y4_ref = jax.nn.silu(x4) @ w4
    assert jnp.allclose(y4, y4_ref, atol=1e-3, rtol=1e-3)

    # ---- Test 5: N-D input through the module (leading dims reshape) ------
    x5 = jax.random.normal(k_x, (2, 7, in_features), dtype=jnp.float32)
    y5 = layer2(x5)
    jax.block_until_ready(y5)
    y5_ref = jax.nn.silu(x5) @ layer2.weight_t + layer2.bias[None, :]
    assert y5.shape == (2, 7, out_features)
    assert jnp.allclose(y5, y5_ref, atol=1e-4, rtol=1e-4)

    print("KERNEL_OK")
</pallas_src>

<mosaic_0001>
module attributes {stable_mosaic.version = 11 : i64} {
  func.func @_kernel_fast_bias(%arg0: i32, %arg1: i32, %arg2: memref<8x32xf32, #tpu.memory_space<vmem>>, %arg3: memref<32x64xf32, #tpu.memory_space<vmem>>, %arg4: memref<1x64xf32, #tpu.memory_space<vmem>>, %arg5: memref<8x64xf32, #tpu.memory_space<vmem>>) attributes {dimension_semantics = [#tpu.dimension_semantics<parallel>, #tpu.dimension_semantics<parallel>], iteration_bounds = array<i64: 2, 1>, scalar_prefetch = 0 : i64, scratch_operands = 0 : i64, tpu.core_type = #tpu.core_type<tc>, window_params = [{transform_indices = @transform_0, window_bounds = array<i64: 8, 32>}, {transform_indices = @transform_1, window_bounds = array<i64: 32, 64>}, {transform_indices = @transform_2, window_bounds = array<i64: 1, 64>}, {transform_indices = @transform_3, window_bounds = array<i64: 8, 64>}]} {
    %c0 = arith.constant 0 : index
    %c0_0 = arith.constant 0 : index
    %0 = vector.load %arg2[%c0, %c0_0] : memref<8x32xf32, #tpu.memory_space<vmem>>, vector<8x32xf32>
    %c0_1 = arith.constant 0 : index
    %c0_2 = arith.constant 0 : index
    %1 = vector.load %arg3[%c0_1, %c0_2] : memref<32x64xf32, #tpu.memory_space<vmem>>, vector<32x64xf32>
    %cst = arith.constant dense<0.000000e+00> : vector<8x64xf32>
    %2 = tpu.matmul %0, %1, %cst {dimension_numbers = #tpu.dot_dimension_numbers<[1], [0], [0], [1], [0, 0, 1, 1], [], []>} : vector<8x32xf32>, vector<32x64xf32>, vector<8x64xf32> -> vector<8x64xf32>
    %c0_3 = arith.constant 0 : index
    %c0_4 = arith.constant 0 : index
    %3 = vector.load %arg4[%c0_3, %c0_4] : memref<1x64xf32, #tpu.memory_space<vmem>>, vector<1x64xf32>
    %4 = vector.broadcast %3 : vector<1x64xf32> to vector<8x64xf32>
    %5 = arith.addf %2, %4 : vector<8x64xf32>
    %c0_5 = arith.constant 0 : index
    %c0_6 = arith.constant 0 : index
    %6 = vector.load %arg5[%c0_5, %c0_6] : memref<8x64xf32, #tpu.memory_space<vmem>>, vector<8x64xf32>
    tpu.vector_store %arg5[%c0_5, %c0_6], %5 {strides = array<i32>} : memref<8x64xf32, #tpu.memory_space<vmem>>, vector<8x64xf32>,
    return
  }
  func.func @transform_0(%arg0: i32, %arg1: i32) -> (i32, i32) {
    %c0_i32 = arith.constant 0 : i32
    %c0_i32_0 = arith.constant 0 : i32
    return %arg0, %c0_i32 : i32, i32
  }
  func.func @transform_1(%arg0: i32, %arg1: i32) -> (i32, i32) {
    %c0_i32 = arith.constant 0 : i32
    %c0_i32_0 = arith.constant 0 : i32
    return %c0_i32, %arg1 : i32, i32
  }
  func.func @transform_2(%arg0: i32, %arg1: i32) -> (i32, i32) {
    %c0_i32 = arith.constant 0 : i32
    %c0_i32_0 = arith.constant 0 : i32
    return %c0_i32, %arg1 : i32, i32
  }
  func.func @transform_3(%arg0: i32, %arg1: i32) -> (i32, i32) {
    %c0_i32 = arith.constant 0 : i32
    return %arg0, %arg1 : i32, i32
  }
}

</mosaic_0001>

<llo_original>
// kernel: tpu_custom_call.1
$region0: #{tpu_custom_call.1}
  #allocation0 [shape = 'u32[]', space=smem, size = 0x4, offset = 0x4, fixed_abs, tag = 'smem constant byte address 0x4 - core index']
  #allocation1 [shape = 'u32[72,128]{1,0:T(1,128)}', space=vmem, size = 0x9000, scoped, tag = 'internal scratch']
  %s0 = inlined_call_operand.hbm [shape: f32[16,32], index: 0, kind: input, shape index: {}]
  %s1 = inlined_call_operand.hbm [shape: f32[32,64], index: 1, kind: input, shape index: {}]
  %s2 = inlined_call_operand.vmem [shape: f32[1,64], index: 2, kind: input, shape index: {}]
  %s3 = inlined_call_operand.hbm [shape: f32[16,64], index: 3, kind: output, shape index: {}]
  %s4 = sld [smem:[#allocation0]]
  $region53: #{tpu_custom_call.1} parent=0
    _
  %s6 = ssub.s32 1, %s4
  %s7 = scalar_select 0, %s6, %s4
  $region1: #{tpu_custom_call.1} parent=0
    #allocation2 [shape = 'u8[8192]{0}', space=vmem, size = 0x2000, scoped, tag = 'input window, operand 0']
    #allocation3 [shape = 's32[2]{0}', space=sflag, size = 0x8, scoped, tag = 'scoped memory for tpu_custom_call.1']
    #allocation4 [shape = 's32[2]{0}', space=sflag, size = 0x8, scoped, tag = 'scoped memory for tpu_custom_call.1']
    #allocation5 [shape = 'u8[16384]{0}', space=vmem, size = 0x4000, scoped, tag = 'input window, operand 1, single buffered']
    #allocation6 [shape = 's32[1]{0}', space=sflag, size = 0x4, scoped, tag = 'scoped memory for tpu_custom_call.1']
    #allocation7 [shape = 'u8[8192]{0}', space=vmem, size = 0x2000, scoped, tag = 'output window, operand 0']
    %8 = vsyncpa [#allocation3], 0
    %s9 = scalar_lea.sflag [#allocation3], 1
    %10 = vsyncpa %s9, 0
    %11 = vsyncpa [#allocation6], 0
    %12 = vsyncpa [#allocation4], 0
    %s13 = scalar_lea.sflag [#allocation4], 1
    %14 = vsyncpa %s13, 0
    loop: start=0, step=1, limit=4
    $region2: #{tpu_custom_call.1} parent=1 // loop_pre_header
      _
    $region3: #{tpu_custom_call.1} parent=1 // loop_header
      %s16 = sphi 0, %s20
      %p17 = scmp.ge.s32.totalorder %s16, 4
      %s23 = sphi 0, %s35
      %s24 = sphi 0, %s31
      %s25 = sphi 0, %s23
      %s26 = sphi 0, %s24
      %s27 = sphi 0, %s25
      %s28 = sphi 0, %s26
      %s38 = sphi 0, %s40
      %s41 = sphi 0, %s38
      %s42 = sphi 0, %s41
      %s58 = sphi 0, %s42
      %s64 = sphi 0, %s66
      %s67 = sphi 0, %s64
      %s68 = sphi 0, %s67
      %s84 = sphi 0, %s68
      %s90 = sphi 0, %s92
      %s93 = sphi 0, %s90
      %s94 = sphi 0, %s93
      %s110 = sphi 0, %s94
      %s118 = sphi 0, %s120
      %s121 = sphi 0, %s118
      %s122 = sphi 0, %s121
      %s138 = sphi 0, %s122
    $region4: #{tpu_custom_call.1} parent=1 // loop_header_branch
      %19 = sbr.rel (%p17) target = $region8
    $region5: #{tpu_custom_call.1} parent=1 // loop_body
      %s21 = ssub.s32 %s16, 1
      %s22 = ssub.s32 %s16, 2
      %s29 = sadd.s32 1, %s24
      %p30 = scmp.ge.s32.totalorder %s29, 1
      %s31 = scalar_select %p30, 0, %s29
      %s32 = sadd.s32 1, %s23
      %s33 = scalar_select %p30, %s32, %s23
      %p34 = scmp.ge.s32.totalorder %s33, 2
      %s35 = scalar_select %p34, 0, %s33
      %s36 = ssub.s32 %s23, %s35
      %p37 = scmp.eq.s32.totalorder %s36, 0
      %s39 = sadd.s32 %s38, 1
      %s40 = scalar_select %p37, %s38, %s39
      %p43 = pneg %p37
      %p44 = scmp.eq.s32.totalorder %s16, 1
      %p45 = por %p43, %p44
      %p46 = scmp.ne.s32.totalorder %s38, %s41
      %p47 = scmp.eq.s32.totalorder %s16, 0
      %p48 = por %p46, %p47
      %p49 = scmp.ne.s32.totalorder %s38, %s41
      %p50 = scmp.eq.s32.totalorder %s21, 1
      %p51 = por %p49, %p50
      %p52 = scmp.ne.s32.totalorder %s41, %s42
      %p53 = scmp.eq.s32.totalorder %s21, 0
      %p54 = por %p52, %p53
      %p55 = scmp.ne.s32.totalorder %s41, %s42
      %p56 = scmp.eq.s32.totalorder %s22, 1
      %p57 = por %p55, %p56
      %p59 = scmp.ne.s32.totalorder %s42, %s58
      %p60 = scmp.eq.s32.totalorder %s22, 0
      %p61 = por %p59, %p60
      %s62 = ssub.s32 %s24, %s31
      %p63 = scmp.eq.s32.totalorder %s62, 0
      %s65 = sadd.s32 %s64, 1
      %s66 = scalar_select %p63, %s64, %s65
      %p69 = pneg %p63
      %p70 = scmp.eq.s32.totalorder %s16, 1
      %p71 = por %p69, %p70
      %p72 = scmp.ne.s32.totalorder %s64, %s67
      %p73 = scmp.eq.s32.totalorder %s16, 0
      %p74 = por %p72, %p73
      %p75 = scmp.ne.s32.totalorder %s64, %s67
      %p76 = scmp.eq.s32.totalorder %s21, 1
      %p77 = por %p75, %p76
      %p78 = scmp.ne.s32.totalorder %s67, %s68
      %p79 = scmp.eq.s32.totalorder %s21, 0
      %p80 = por %p78, %p79
      %p81 = scmp.ne.s32.totalorder %s67, %s68
      %p82 = scmp.eq.s32.totalorder %s22, 1
      %p83 = por %p81, %p82
      %p85 = scmp.ne.s32.totalorder %s68, %s84
      %p86 = scmp.eq.s32.totalorder %s22, 0
      %p87 = por %p85, %p86
      %s88 = ssub.s32 %s24, %s31
      %p89 = scmp.eq.s32.totalorder %s88, 0
      %s91 = sadd.s32 %s90, 1
      %s92 = scalar_select %p89, %s90, %s91
      %p95 = pneg %p89
      %p96 = scmp.eq.s32.totalorder %s16, 1
      %p97 = por %p95, %p96
      %p98 = scmp.ne.s32.totalorder %s90, %s93
      %p99 = scmp.eq.s32.totalorder %s16, 0
      %p100 = por %p98, %p99
      %p101 = scmp.ne.s32.totalorder %s90, %s93
      %p102 = scmp.eq.s32.totalorder %s21, 1
      %p103 = por %p101, %p102
      %p104 = scmp.ne.s32.totalorder %s93, %s94
      %p105 = scmp.eq.s32.totalorder %s21, 0
      %p106 = por %p104, %p105
      %p107 = scmp.ne.s32.totalorder %s93, %s94
      %p108 = scmp.eq.s32.totalorder %s22, 1
      %p109 = por %p107, %p108
      %p111 = scmp.ne.s32.totalorder %s94, %s110
      %p112 = scmp.eq.s32.totalorder %s22, 0
      %p113 = por %p111, %p112
      %s114 = ssub.s32 %s23, %s35
      %s115 = ssub.s32 %s24, %s31
      %s116 = sor.u32 %s114, %s115
      %p117 = scmp.eq.s32.totalorder %s116, 0
      %s119 = sadd.s32 %s118, 1
      %s120 = scalar_select %p117, %s118, %s119
      %p123 = pneg %p117
      %p124 = scmp.eq.s32.totalorder %s16, 1
      %p125 = por %p123, %p124
      %p126 = scmp.ne.s32.totalorder %s118, %s121
      %p127 = scmp.eq.s32.totalorder %s16, 0
      %p128 = por %p126, %p127
      %p129 = scmp.ne.s32.totalorder %s118, %s121
      %p130 = scmp.eq.s32.totalorder %s21, 1
      %p131 = por %p129, %p130
      %p132 = scmp.ne.s32.totalorder %s121, %s122
      %p133 = scmp.eq.s32.totalorder %s21, 0
      %p134 = por %p132, %p133
      %p135 = scmp.ne.s32.totalorder %s121, %s122
      %p136 = scmp.eq.s32.totalorder %s22, 1
      %p137 = por %p135, %p136
      %p139 = scmp.ne.s32.totalorder %s122, %s138
      %p140 = scmp.eq.s32.totalorder %s22, 0
      %p141 = por %p139, %p140
      %p142 = scmp.le.s32.totalorder 1, %s16
      %p143 = scmp.lt.s32.totalorder %s16, 3
      %p144 = pnand %p142, %p143
      %p145 = pneg %p144
      // Predicated region
      $region9: #{tpu_custom_call.1} parent=5 // pred_check
        _
      $region10: #{tpu_custom_call.1} parent=5 // pred_check_branch
        %147 = sbr.rel (%p144) target = $region12
      $region11: #{tpu_custom_call.1} parent=5 // pred_region
        %s148 = ssub.s32 %s16, 1
        // Predicated region
        $region13: #{tpu_custom_call.1} parent=11 // pred_check
          %p149 = pneg %p80
        $region14: #{tpu_custom_call.1} parent=11 // pred_check_branch
          %151 = sbr.rel (%p149) target = $region16
        $region15: #{tpu_custom_call.1} parent=11 // pred_region
          %153 = vsyncadd [#allocation6], 0
          %s154 = smul.addr %s26, 8
          %s155 = scalar_lea.hbm %s1, %s154
          %s156 = sshll.u32 %s155, 4
          %s157 = int_to_ptr.hbm [resolvable:$true] %s156
          %s158 = sshll.u32 [#allocation5], 4
          %s159 = int_to_ptr.vmem [resolvable:$true] %s158
          %164 = dma.hbm_to_vmem [thread:$0]  %s157, 512, %s159, [#allocation6], 128, 128, 8
        $region16: #{tpu_custom_call.1} parent=11 // pred_fallthru
          _
        // Predicated region
        $region17: #{tpu_custom_call.1} parent=11 // pred_check
          %p165 = pneg %p106
        $region18: #{tpu_custom_call.1} parent=11 // pred_check_branch
          %167 = sbr.rel (%p165) target = $region20
        $region19: #{tpu_custom_call.1} parent=11 // pred_region
          %p168 = scmp.lt.s32.totalorder %s26, 0
          %s169 = scalar_select %p168, %s26, 0
          %s170 = scalar_lea.vmem %s2, %s169
        $region20: #{tpu_custom_call.1} parent=11 // pred_fallthru
          _
      $region12: #{tpu_custom_call.1} parent=5 // pred_fallthru
        _
      %p171 = scmp.lt.s32.totalorder %s16, 2
      // Predicated region
      $region21: #{tpu_custom_call.1} parent=5 // pred_check
        %p172 = pneg %p171
      $region22: #{tpu_custom_call.1} parent=5 // pred_check_branch
        %174 = sbr.rel (%p172) target = $region24
      $region23: #{tpu_custom_call.1} parent=5 // pred_region
        // Predicated region
        $region25: #{tpu_custom_call.1} parent=23 // pred_check
          %p175 = pneg %p48
        $region26: #{tpu_custom_call.1} parent=23 // pred_check_branch
          %177 = sbr.rel (%p175) target = $region28
        $region27: #{tpu_custom_call.1} parent=23 // pred_region
          %s178 = sand.u32 %s38, 1
          %s179 = scalar_lea.sflag [#allocation3], %s178
          %s180 = sand.u32 %s38, 1
          %s181 = smul.addr %s180, 8
          %s182 = scalar_lea.vmem [#allocation2], %s181
          %184 = vsyncadd %s179, 0
          %s185 = smul.addr %s23, 8
          %s186 = scalar_lea.hbm %s0, %s185
          %s188 = sshll.u32 %s186, 4
          %s189 = int_to_ptr.hbm [resolvable:$true] %s188
          %s190 = sshll.u32 %s182, 4
          %s191 = int_to_ptr.vmem [resolvable:$true] %s190
          %193 = dma.hbm_to_vmem [thread:$0]  %s189, 128, %s191, %s179
        $region28: #{tpu_custom_call.1} parent=23 // pred_fallthru
          _
      $region24: #{tpu_custom_call.1} parent=5 // pred_fallthru
        _
      %p194 = scmp.le.s32.totalorder 1, %s16
      %p195 = scmp.lt.s32.totalorder %s16, 3
      %p196 = pnand %p194, %p195
      %p197 = pneg %p196
      // Predicated region
      $region29: #{tpu_custom_call.1} parent=5 // pred_check
        _
      $region30: #{tpu_custom_call.1} parent=5 // pred_check_branch
        %199 = sbr.rel (%p196) target = $region32
      $region31: #{tpu_custom_call.1} parent=5 // pred_region
        %s200 = ssub.s32 %s16, 1
        %s201 = sand.u32 %s41, 1
        %s202 = scalar_lea.sflag [#allocation3], %s201
        %s203 = sand.u32 %s41, 1
        %s204 = smul.addr %s203, 8
        %s205 = scalar_lea.vmem [#allocation2], %s204
        // Predicated region
        $region33: #{tpu_custom_call.1} parent=31 // pred_check
          %p206 = pneg %p54
        $region34: #{tpu_custom_call.1} parent=31 // pred_check_branch
          %208 = sbr.rel (%p206) target = $region36
        $region35: #{tpu_custom_call.1} parent=31 // pred_region
          %210 = dma.done %s202, 128
        $region36: #{tpu_custom_call.1} parent=31 // pred_fallthru
          _
        // Predicated region
        $region37: #{tpu_custom_call.1} parent=31 // pred_check
          %p211 = pneg %p80
        $region38: #{tpu_custom_call.1} parent=31 // pred_check_branch
          %213 = sbr.rel (%p211) target = $region40
        $region39: #{tpu_custom_call.1} parent=31 // pred_region
          %215 = dma.done [#allocation6], 512
        $region40: #{tpu_custom_call.1} parent=31 // pred_fallthru
          _
        %s216 = sand.u32 %s41, 1
        %s217 = scalar_lea.sflag [#allocation3], %s216
        %s218 = sand.u32 %s41, 1
        %s219 = smul.addr %s218, 8
        %s220 = scalar_lea.vmem [#allocation2], %s219
        %p221 = pneg %p54
        %p222 = pneg %p51
        %p223 = pneg %p80
        %p224 = pneg %p77
        %p225 = scmp.lt.s32.totalorder %s26, 0
        %s226 = scalar_select %p225, %s26, 0
        %s227 = scalar_lea.vmem %s2, %s226
        %p228 = pneg %p106
        %p229 = pneg %p103
        %p230 = pneg %p134
        %p231 = pneg %p131
        %s232 = sand.u32 %s121, 1
        %s233 = scalar_lea.sflag [#allocation4], %s232
        %s234 = sand.u32 %s121, 1
        %s235 = smul.addr %s234, 8
        %s236 = scalar_lea.vmem [#allocation7], %s235
        %p237 = scmp.lt.s32.totalorder %s26, 0
        %s238 = scalar_select %p237, %s26, 0
        %s239 = scalar_lea.vmem %s2, %s238
        %v240 = vld [vmem:[%s205] sm:$0xff]
        %v241 = vld [vmem:[#allocation5] sm:$0xff]
        %v242 = vld [vmem:[#allocation5 + $0x8] sm:$0xff]
        %v243 = vld [vmem:[#allocation5 + $0x10] sm:$0xff]
        %v244 = vld [vmem:[#allocation5 + $0x18] sm:$0xff]
        %v245 = vld [vmem:[%s239] sm:$0x1]
        %v247 = vperm.slane %v245, 0
        %vm249 = vcmask 261120
        %v251 = vsel %vm249, %v240, 0
        %253 = vmatpush.msra.mxu0 0.0
        %254 = vmatpush.msra.mxu0 0.0
        %255 = vmatpush.msra.mxu0 0.0
        %256 = vmatpush.msra.mxu0 0.0
        %257 = vmatpush.msra.mxu0 0.0
        %258 = vmatpush.msra.mxu0 0.0
        %259 = vmatpush.msra.mxu0 0.0
        %260 = vmatpush.msra.mxu0 0.0
        %261 = vmatpush.msra.mxu0 0.0
        %262 = vmatpush.msra.mxu0 0.0
        %263 = vmatpush.msra.mxu0 0.0
        %264 = vmatpush.msra.mxu0 0.0
        %265 = vmatpush.msra.mxu0 %v244
        %266 = vmatpush.msra.mxu0 %v243
        %267 = vmatpush.msra.mxu0 %v242
        %268 = vmatpush.msra.mxu0 %v241
        %269 = vmatmul.f32.gmra.mxu0 %v251
        %v270 = vpop.f32.mrf.mxu0
        %v271 = vadd.f32 %v247, %v270
        %272 = vdwg.mxu0
        %vm273 = vcmask 523264
        %274 = vst.msk [vmem:[%s236] sm:$0xff] %vm273, %v271
        %s275 = sand.u32 %s121, 1
        %s276 = scalar_lea.sflag [#allocation4], %s275
        %s277 = sand.u32 %s121, 1
        %s278 = smul.addr %s277, 8
        %s279 = scalar_lea.vmem [#allocation7], %s278
        // Predicated region
        $region41: #{tpu_custom_call.1} parent=31 // pred_check
          %p280 = pneg %p131
        $region42: #{tpu_custom_call.1} parent=31 // pred_check_branch
          %282 = sbr.rel (%p280) target = $region44
        $region43: #{tpu_custom_call.1} parent=31 // pred_region
          %284 = vsyncadd %s276, 0
          %s285 = sadd.s32 %s26, %s25
          %s286 = smul.addr %s285, 8
          %s287 = scalar_lea.hbm %s3, %s286
          %s289 = sshll.u32 %s279, 4
          %s290 = int_to_ptr.vmem [resolvable:$true] %s289
          %s291 = sshll.u32 %s287, 4
          %s292 = int_to_ptr.hbm [resolvable:$true] %s291
          %294 = dma.vmem_to_hbm [thread:$0]  %s290, 128, %s292, %s276
        $region44: #{tpu_custom_call.1} parent=31 // pred_fallthru
          _
      $region32: #{tpu_custom_call.1} parent=5 // pred_fallthru
        _
      %p295 = scmp.le.s32.totalorder 2, %s16
      // Predicated region
      $region45: #{tpu_custom_call.1} parent=5 // pred_check
        %p296 = pneg %p295
      $region46: #{tpu_custom_call.1} parent=5 // pred_check_branch
        %298 = sbr.rel (%p296) target = $region48
      $region47: #{tpu_custom_call.1} parent=5 // pred_region
        %s299 = ssub.s32 %s16, 2
        // Predicated region
        $region49: #{tpu_custom_call.1} parent=47 // pred_check
          %p300 = pneg %p137
        $region50: #{tpu_custom_call.1} parent=47 // pred_check_branch
          %302 = sbr.rel (%p300) target = $region52
        $region51: #{tpu_custom_call.1} parent=47 // pred_region
          %s303 = sand.u32 %s122, 1
          %s304 = scalar_lea.sflag [#allocation4], %s303
          %s305 = sand.u32 %s122, 1
          %s306 = smul.addr %s305, 8
          %s307 = scalar_lea.vmem [#allocation7], %s306
          %309 = dma.done %s304, 128
        $region52: #{tpu_custom_call.1} parent=47 // pred_fallthru
          _
      $region48: #{tpu_custom_call.1} parent=5 // pred_fallthru
        _
    $region6: #{tpu_custom_call.1} parent=1 // loop_footer
      %s20 = sadd.s32 1, %s16
    $region7: #{tpu_custom_call.1} parent=1 // loop_footer_branch
      %15 = sbr.rel target = $region3
    $region8: #{tpu_custom_call.1} parent=1 // loop_exit
      _
    %310 = vsyncpa [#allocation3], 1
    %s311 = scalar_lea.sflag [#allocation3], 1
    %312 = vsyncpa %s311, 1
    %313 = vsyncpa [#allocation6], 1
    %314 = vsyncpa [#allocation4], 1
    %s315 = scalar_lea.sflag [#allocation4], 1
    %316 = vsyncpa %s315, 1

</llo_original>
